<compile_context>
chip_gen: v5e
topology: v5e:2x2
jax: 0.10.0
libtpu: 0.0.40
codegen_flags: <defaults>
</compile_context>

<pallas_src>
import functools

import jax
import jax.numpy as jnp
from jax import lax
from jax.experimental import pallas as pl
from jax.experimental.pallas import tpu as pltpu

_LANE = 128
_SUBLANE = 8
_TB_CAP = 1024                      # max batch-tile rows
_VMEM_BUDGET = 20 * 1024 * 1024     # tile-selection budget (headroom vs limit)
_VMEM_LIMIT = 32 * 1024 * 1024      # scoped VMEM limit (safe on v5e/v6e/v7x)


def _round_up(x, m):
    return (x + m - 1) // m * m


def _cdiv(a, b):
    return -(-a // b)


def _classifier_kernel(x_ref, w1_ref, b1_ref, w2_ref, b2_ref, w3_ref, b3_ref,
                       logits_ref, l2_ref, *, use_decay, tb, batch, batch_pad):
    # x arrives f32 straight from HBM (4 B/elem, single read); cast to bf16 in
    # VMEM right before the MXU dot -- VPU work hidden under the x DMA.
    x = x_ref[...].astype(jnp.bfloat16)                       # (TB, d_in_p)

    # fc1 + ReLU   (bf16 MXU inputs, f32 accumulate / bias / ReLU)
    a1 = jnp.dot(x, w1_ref[...], preferred_element_type=jnp.float32) + b1_ref[...]
    a1 = jnp.maximum(a1, 0.0)

    # fc2 + ReLU
    a2 = jnp.dot(a1.astype(w2_ref.dtype), w2_ref[...],
                 preferred_element_type=jnp.float32) + b2_ref[...]
    a2 = jnp.maximum(a2, 0.0)

    # fc3: f32 accumulate + bias, bf16 store (halves the logits writeback).
    logits = jnp.dot(a2.astype(w3_ref.dtype), w3_ref[...],
                     preferred_element_type=jnp.float32) + b3_ref[...]
    logits_ref[...] = logits.astype(logits_ref.dtype)

    # Per-block l2 partial, broadcast across 128 lanes (lane-dense store).
    if use_decay:
        a1sq = a1 * a1
        a2sq = a2 * a2
        if batch_pad != batch:
            # Mask zero-padded batch rows out of the l2 reduction.
            row = pl.program_id(0) * tb + lax.broadcasted_iota(
                jnp.int32, (tb, 1), 0)
            valid = row < batch
            a1sq = jnp.where(valid, a1sq, 0.0)
            a2sq = jnp.where(valid, a2sq, 0.0)
        partial = jnp.sum(a1sq) + jnp.sum(a2sq)
    else:
        partial = jnp.float32(0.0)
    l2_ref[...] = jnp.zeros_like(l2_ref) + partial


def _pick_batch_tile(B, d_in_p, c_p, resident_weight_bytes):
    """VMEM-aware, balanced batch tiling with >= 2 blocks (v7x dual-TC)."""
    # Per-batch-row VMEM: double-buffered f32 x tile + double-buffered bf16
    # logits tile.  Weights/biases are resident (double-buffered once).
    per_row = d_in_p * 4 * 2 + c_p * 2 * 2
    avail = max(_VMEM_BUDGET - 2 * resident_weight_bytes, per_row * _SUBLANE)
    cap = (avail // per_row) // _SUBLANE * _SUBLANE
    cap = max(_SUBLANE, min(_TB_CAP, cap))
    nb = max(2, _cdiv(B, cap))               # >= 2 blocks so both v7x TCs work
    tb = _round_up(_cdiv(B, nb), _SUBLANE)   # balanced: <= 7 pad rows / block
    return tb, nb


@functools.partial(jax.jit, static_argnames=("use_decay",))
def classifier_forward(x, params, use_decay=True):
    """x: (B, C, H, W) float32 (NCHW, like PyTorch). Returns (logits, l2_decay)."""
    w1, b1, w2, b2, w3, b3 = params
    B = x.shape[0]
    d_in, n_hidden = w1.shape
    n_classes = w3.shape[1]

    f32, bf16 = jnp.float32, jnp.bfloat16

    # Lane-pad every feature dimension (exactly to 128 -- no wider).
    d_in_p = _round_up(d_in, _LANE)
    h_p = _round_up(n_hidden, _LANE)
    c_p = _round_up(n_classes, _LANE)

    resident_w_bytes = (d_in_p * h_p + h_p * h_p + h_p * c_p) * 2 \
        + (2 * h_p + c_p) * 4
    tb, num_blocks = _pick_batch_tile(B, d_in_p, c_p, resident_w_bytes)
    b_p = tb * num_blocks

    # Glue: NCHW flatten (== nn.Flatten on a contiguous NCHW tensor).  x stays
    # f32 -- the kernel casts to bf16 in VMEM, so there is no separately
    # materialized padded bf16 copy of x.  Padding only happens for unaligned
    # B / d_in (zero-copy in the aligned case).
    x2d = x.reshape(B, d_in).astype(f32)
    if b_p != B or d_in_p != d_in:
        x2d = jnp.pad(x2d, ((0, b_p - B), (0, d_in_p - d_in)))

    w1p = jnp.pad(w1.astype(f32), ((0, d_in_p - d_in), (0, h_p - n_hidden))).astype(bf16)
    w2p = jnp.pad(w2.astype(f32), ((0, h_p - n_hidden), (0, h_p - n_hidden))).astype(bf16)
    w3p = jnp.pad(w3.astype(f32), ((0, h_p - n_hidden), (0, c_p - n_classes))).astype(bf16)
    b1p = jnp.pad(b1.astype(f32), ((0, 0), (0, h_p - n_hidden)))
    b2p = jnp.pad(b2.astype(f32), ((0, 0), (0, h_p - n_hidden)))
    b3p = jnp.pad(b3.astype(f32), ((0, 0), (0, c_p - n_classes)))

    kernel = functools.partial(_classifier_kernel, use_decay=use_decay,
                               tb=tb, batch=B, batch_pad=b_p)

    flops = 2 * b_p * (d_in_p * h_p + h_p * h_p + h_p * c_p)
    bytes_accessed = (
        b_p * d_in_p * 4                                 # x (f32, single read)
        + (w1p.size + w2p.size + w3p.size) * 2           # bf16 weights
        + (b1p.size + b2p.size + b3p.size) * 4           # f32 biases
        + b_p * c_p * 2                                  # bf16 logits writeback
        + num_blocks * _LANE * 4                         # l2 partials
    )

    logits_p, l2_p = pl.pallas_call(
        kernel,
        grid=(num_blocks,),
        in_specs=[
            pl.BlockSpec((tb, d_in_p), lambda i: (i, 0)),     # x: streamed/pipelined
            pl.BlockSpec((d_in_p, h_p), lambda i: (0, 0)),    # weights: VMEM-resident
            pl.BlockSpec((1, h_p), lambda i: (0, 0)),
            pl.BlockSpec((h_p, h_p), lambda i: (0, 0)),
            pl.BlockSpec((1, h_p), lambda i: (0, 0)),
            pl.BlockSpec((h_p, c_p), lambda i: (0, 0)),
            pl.BlockSpec((1, c_p), lambda i: (0, 0)),
        ],
        out_specs=(
            pl.BlockSpec((tb, c_p), lambda i: (i, 0)),        # lane-dense bf16 logits
            pl.BlockSpec((1, _LANE), lambda i: (0, i)),       # per-block l2 partial
        ),
        out_shape=(
            jax.ShapeDtypeStruct((b_p, c_p), bf16),
            jax.ShapeDtypeStruct((1, _LANE * num_blocks), f32),
        ),
        compiler_params=pltpu.CompilerParams(
            dimension_semantics=("parallel",),
            vmem_limit_bytes=_VMEM_LIMIT,
        ),
        cost_estimate=pl.CostEstimate(flops=flops, transcendentals=0,
                                      bytes_accessed=bytes_accessed),
    )(x2d, w1p, b1p, w2p, b2p, w3p, b3p)

    # NOTE: perf-sensitive consumers (loss/softmax) can take the padded bf16
    # `logits_p` directly and mask/slice themselves to skip this compaction
    # pass; kept here to match the module's (B, n_classes) f32 contract.
    logits = logits_p[:B, :n_classes].astype(f32)
    l2 = jnp.sum(l2_p.reshape(num_blocks, _LANE)[:, 0])
    return logits, l2


def init_params(key, img_size, img_n_channels, n_classes, n_neurons):
    """Deterministic init mimicking PyTorch nn.Linear's U(-1/sqrt(fan_in), ...)."""
    d_in = img_n_channels * img_size * img_size
    keys = jax.random.split(key, 6)

    def linear(kw, kb, fan_in, fan_out):
        bound = 1.0 / jnp.sqrt(jnp.float32(fan_in))
        w = jax.random.uniform(kw, (fan_in, fan_out), jnp.float32, -bound, bound)
        b = jax.random.uniform(kb, (1, fan_out), jnp.float32, -bound, bound)
        return w, b

    w1, b1 = linear(keys[0], keys[1], d_in, n_neurons)
    w2, b2 = linear(keys[2], keys[3], n_neurons, n_neurons)
    w3, b3 = linear(keys[4], keys[5], n_neurons, n_classes)
    return (w1, b1, w2, b2, w3, b3)


def _reference_forward(x, params, use_decay=True):
    """Pure-JAX f32 reference for sanity checking."""
    w1, b1, w2, b2, w3, b3 = params
    x2d = x.reshape(x.shape[0], -1)
    a1 = jnp.maximum(x2d @ w1 + b1, 0.0)
    a2 = jnp.maximum(a1 @ w2 + b2, 0.0)
    logits = a2 @ w3 + b3
    l2 = jnp.sum(a1 ** 2) + jnp.sum(a2 ** 2) if use_decay else jnp.float32(0.0)
    return logits, l2


if __name__ == "__main__":
    # Small shapes consistent with the module's constructor.
    img_size = 16
    img_n_channels = 4
    n_classes = 10
    n_neurons = 32
    batch = 2

    key = jax.random.PRNGKey(0)
    k_params, k_x = jax.random.split(key)

    params = init_params(k_params, img_size, img_n_channels, n_classes, n_neurons)
    x = jax.random.normal(k_x, (batch, img_n_channels, img_size, img_size),
                          dtype=jnp.float32)

    # use_decay=True path
    logits, l2_decay = classifier_forward(x, params, use_decay=True)
    logits = jax.block_until_ready(logits)
    l2_decay = jax.block_until_ready(l2_decay)

    ref_logits, ref_l2 = _reference_forward(x, params, use_decay=True)
    # bf16 MXU inputs / bf16 logits store (f32 accumulation) -> loosened tolerance.
    assert logits.shape == (batch, n_classes)
    assert jnp.allclose(logits, ref_logits, atol=5e-2, rtol=5e-2)
    assert jnp.allclose(l2_decay, ref_l2, atol=5e-2, rtol=5e-2)

    # use_decay=False path: l2 must be exactly 0, logits unchanged.
    logits0, l2_0 = classifier_forward(x, params, use_decay=False)
    logits0 = jax.block_until_ready(logits0)
    l2_0 = jax.block_until_ready(l2_0)
    assert jnp.allclose(logits0, logits, atol=1e-6)
    assert float(l2_0) == 0.0

    print("KERNEL_OK")
</pallas_src>

<mosaic_0001>
module attributes {stable_mosaic.version = 11 : i64} {
  func.func @_classifier_kernel(%arg0: i32, %arg1: memref<8x1024xf32, #tpu.memory_space<vmem>>, %arg2: memref<1024x128xbf16, #tpu.memory_space<vmem>>, %arg3: memref<1x128xf32, #tpu.memory_space<vmem>>, %arg4: memref<128x128xbf16, #tpu.memory_space<vmem>>, %arg5: memref<1x128xf32, #tpu.memory_space<vmem>>, %arg6: memref<128x128xbf16, #tpu.memory_space<vmem>>, %arg7: memref<1x128xf32, #tpu.memory_space<vmem>>, %arg8: memref<8x128xbf16, #tpu.memory_space<vmem>>, %arg9: memref<1x128xf32, #tpu.memory_space<vmem>>) attributes {dimension_semantics = [#tpu.dimension_semantics<parallel>], iteration_bounds = array<i64: 2>, scalar_prefetch = 0 : i64, scratch_operands = 0 : i64, tpu.core_type = #tpu.core_type<tc>, window_params = [{transform_indices = @transform_0, window_bounds = array<i64: 8, 1024>}, {pipeline_mode = #tpu.pipeline_mode<synchronous>, transform_indices = @transform_1, window_bounds = array<i64: 1024, 128>}, {pipeline_mode = #tpu.pipeline_mode<synchronous>, transform_indices = @transform_2, window_bounds = array<i64: 1, 128>}, {pipeline_mode = #tpu.pipeline_mode<synchronous>, transform_indices = @transform_3, window_bounds = array<i64: 128, 128>}, {pipeline_mode = #tpu.pipeline_mode<synchronous>, transform_indices = @transform_4, window_bounds = array<i64: 1, 128>}, {pipeline_mode = #tpu.pipeline_mode<synchronous>, transform_indices = @transform_5, window_bounds = array<i64: 128, 128>}, {pipeline_mode = #tpu.pipeline_mode<synchronous>, transform_indices = @transform_6, window_bounds = array<i64: 1, 128>}, {transform_indices = @transform_7, window_bounds = array<i64: 8, 128>}, {transform_indices = @transform_8, window_bounds = array<i64: 1, 128>}]} {
    %c0 = arith.constant 0 : index
    %c0_0 = arith.constant 0 : index
    %0 = vector.load %arg1[%c0, %c0_0] : memref<8x1024xf32, #tpu.memory_space<vmem>>, vector<8x1024xf32>
    %1 = arith.truncf %0 : vector<8x1024xf32> to vector<8x1024xbf16>
    %c0_1 = arith.constant 0 : index
    %c0_2 = arith.constant 0 : index
    %2 = vector.load %arg2[%c0_1, %c0_2] : memref<1024x128xbf16, #tpu.memory_space<vmem>>, vector<1024x128xbf16>
    %cst = arith.constant dense<0.000000e+00> : vector<8x128xf32>
    %3 = tpu.matmul %1, %2, %cst {dimension_numbers = #tpu.dot_dimension_numbers<[1], [0], [0], [1], [0, 0, 1, 1], [], []>} : vector<8x1024xbf16>, vector<1024x128xbf16>, vector<8x128xf32> -> vector<8x128xf32>
    %c0_3 = arith.constant 0 : index
    %c0_4 = arith.constant 0 : index
    %4 = vector.load %arg3[%c0_3, %c0_4] : memref<1x128xf32, #tpu.memory_space<vmem>>, vector<1x128xf32>
    %5 = vector.broadcast %4 : vector<1x128xf32> to vector<8x128xf32>
    %6 = arith.addf %3, %5 : vector<8x128xf32>
    %cst_5 = arith.constant 0.000000e+00 : f32
    %7 = vector.broadcast %cst_5 : f32 to vector<8x128xf32>
    %8 = arith.maximumf %6, %7 : vector<8x128xf32>
    %9 = arith.truncf %8 : vector<8x128xf32> to vector<8x128xbf16>
    %c0_6 = arith.constant 0 : index
    %c0_7 = arith.constant 0 : index
    %10 = vector.load %arg4[%c0_6, %c0_7] : memref<128x128xbf16, #tpu.memory_space<vmem>>, vector<128x128xbf16>
    %cst_8 = arith.constant dense<0.000000e+00> : vector<8x128xf32>
    %11 = tpu.matmul %9, %10, %cst_8 {dimension_numbers = #tpu.dot_dimension_numbers<[1], [0], [0], [1], [0, 0, 1, 1], [], []>} : vector<8x128xbf16>, vector<128x128xbf16>, vector<8x128xf32> -> vector<8x128xf32>
    %c0_9 = arith.constant 0 : index
    %c0_10 = arith.constant 0 : index
    %12 = vector.load %arg5[%c0_9, %c0_10] : memref<1x128xf32, #tpu.memory_space<vmem>>, vector<1x128xf32>
    %13 = vector.broadcast %12 : vector<1x128xf32> to vector<8x128xf32>
    %14 = arith.addf %11, %13 : vector<8x128xf32>
    %cst_11 = arith.constant 0.000000e+00 : f32
    %15 = vector.broadcast %cst_11 : f32 to vector<8x128xf32>
    %16 = arith.maximumf %14, %15 : vector<8x128xf32>
    %17 = arith.truncf %16 : vector<8x128xf32> to vector<8x128xbf16>
    %c0_12 = arith.constant 0 : index
    %c0_13 = arith.constant 0 : index
    %18 = vector.load %arg6[%c0_12, %c0_13] : memref<128x128xbf16, #tpu.memory_space<vmem>>, vector<128x128xbf16>
    %cst_14 = arith.constant dense<0.000000e+00> : vector<8x128xf32>
    %19 = tpu.matmul %17, %18, %cst_14 {dimension_numbers = #tpu.dot_dimension_numbers<[1], [0], [0], [1], [0, 0, 1, 1], [], []>} : vector<8x128xbf16>, vector<128x128xbf16>, vector<8x128xf32> -> vector<8x128xf32>
    %c0_15 = arith.constant 0 : index
    %c0_16 = arith.constant 0 : index
    %20 = vector.load %arg7[%c0_15, %c0_16] : memref<1x128xf32, #tpu.memory_space<vmem>>, vector<1x128xf32>
    %21 = vector.broadcast %20 : vector<1x128xf32> to vector<8x128xf32>
    %22 = arith.addf %19, %21 : vector<8x128xf32>
    %23 = arith.truncf %22 : vector<8x128xf32> to vector<8x128xbf16>
    %c0_17 = arith.constant 0 : index
    %c0_18 = arith.constant 0 : index
    %24 = vector.load %arg8[%c0_17, %c0_18] : memref<8x128xbf16, #tpu.memory_space<vmem>>, vector<8x128xbf16>
    tpu.vector_store %arg8[%c0_17, %c0_18], %23 {strides = array<i32>} : memref<8x128xbf16, #tpu.memory_space<vmem>>, vector<8x128xbf16>,
    %25 = arith.mulf %8, %8 : vector<8x128xf32>
    %26 = arith.mulf %16, %16 : vector<8x128xf32>
    %c8_i32 = arith.constant 8 : i32
    %27 = arith.muli %arg0, %c8_i32 : i32
    %28 = tpu.iota {dimensions = array<i32: 0>} : vector<8x1xi32>
    %29 = vector.broadcast %27 : i32 to vector<8x1xi32>
    %30 = arith.addi %29, %28 : vector<8x1xi32>
    %c2_i32 = arith.constant 2 : i32
    %31 = vector.broadcast %c2_i32 : i32 to vector<8x1xi32>
    %32 = arith.cmpi slt, %30, %31 : vector<8x1xi32>
    %cst_19 = arith.constant 0.000000e+00 : f32
    %33 = vector.shape_cast %32 : vector<8x1xi1> to vector<8x1xi1>
    %34 = vector.broadcast %33 : vector<8x1xi1> to vector<8x128xi1>
    %35 = vector.broadcast %cst_19 : f32 to vector<8x128xf32>
    %36 = arith.select %34, %25, %35 : vector<8x128xi1>, vector<8x128xf32>
    %cst_20 = arith.constant 0.000000e+00 : f32
    %37 = vector.shape_cast %32 : vector<8x1xi1> to vector<8x1xi1>
    %38 = vector.broadcast %37 : vector<8x1xi1> to vector<8x128xi1>
    %39 = vector.broadcast %cst_20 : f32 to vector<8x128xf32>
    %40 = arith.select %38, %26, %39 : vector<8x128xi1>, vector<8x128xf32>
    %41 = vector.shape_cast %36 : vector<8x128xf32> to vector<1x8x128xf32>
    %cst_21 = arith.constant dense<0.000000e+00> : vector<1xf32>
    %42 = vector.multi_reduction <add>, %41, %cst_21 [1, 2] : vector<1x8x128xf32> to vector<1xf32>
    %43 = vector.shape_cast %42 : vector<1xf32> to vector<1x1x1xf32>
    %44 = vector.extract %43[0, 0, 0] : f32 from vector<1x1x1xf32>
    %45 = vector.shape_cast %40 : vector<8x128xf32> to vector<1x8x128xf32>
    %cst_22 = arith.constant dense<0.000000e+00> : vector<1xf32>
    %46 = vector.multi_reduction <add>, %45, %cst_22 [1, 2] : vector<1x8x128xf32> to vector<1xf32>
    %47 = vector.shape_cast %46 : vector<1xf32> to vector<1x1x1xf32>
    %48 = vector.extract %47[0, 0, 0] : f32 from vector<1x1x1xf32>
    %49 = arith.addf %44, %48 : f32
    %cst_23 = arith.constant 0.000000e+00 : f32
    %50 = vector.broadcast %cst_23 : f32 to vector<1x128xf32>
    %51 = vector.broadcast %49 : f32 to vector<1x128xf32>
    %52 = arith.addf %50, %51 : vector<1x128xf32>
    %c0_24 = arith.constant 0 : index
    %c0_25 = arith.constant 0 : index
    %53 = vector.load %arg9[%c0_24, %c0_25] : memref<1x128xf32, #tpu.memory_space<vmem>>, vector<1x128xf32>
    tpu.vector_store %arg9[%c0_24, %c0_25], %52 {strides = array<i32>} : memref<1x128xf32, #tpu.memory_space<vmem>>, vector<1x128xf32>,
    return
  }
  func.func @transform_0(%arg0: i32) -> (i32, i32) {
    %c0_i32 = arith.constant 0 : i32
    %c0_i32_0 = arith.constant 0 : i32
    return %arg0, %c0_i32 : i32, i32
  }
  func.func @transform_1(%arg0: i32) -> (i32, i32) {
    %c0_i32 = arith.constant 0 : i32
    %c0_i32_0 = arith.constant 0 : i32
    %c0_i32_1 = arith.constant 0 : i32
    return %c0_i32, %c0_i32_0 : i32, i32
  }
  func.func @transform_2(%arg0: i32) -> (i32, i32) {
    %c0_i32 = arith.constant 0 : i32
    %c0_i32_0 = arith.constant 0 : i32
    %c0_i32_1 = arith.constant 0 : i32
    return %c0_i32, %c0_i32_0 : i32, i32
  }
  func.func @transform_3(%arg0: i32) -> (i32, i32) {
    %c0_i32 = arith.constant 0 : i32
    %c0_i32_0 = arith.constant 0 : i32
    %c0_i32_1 = arith.constant 0 : i32
    return %c0_i32, %c0_i32_0 : i32, i32
  }
  func.func @transform_4(%arg0: i32) -> (i32, i32) {
    %c0_i32 = arith.constant 0 : i32
    %c0_i32_0 = arith.constant 0 : i32
    %c0_i32_1 = arith.constant 0 : i32
    return %c0_i32, %c0_i32_0 : i32, i32
  }
  func.func @transform_5(%arg0: i32) -> (i32, i32) {
    %c0_i32 = arith.constant 0 : i32
    %c0_i32_0 = arith.constant 0 : i32
    %c0_i32_1 = arith.constant 0 : i32
    return %c0_i32, %c0_i32_0 : i32, i32
  }
  func.func @transform_6(%arg0: i32) -> (i32, i32) {
    %c0_i32 = arith.constant 0 : i32
    %c0_i32_0 = arith.constant 0 : i32
    %c0_i32_1 = arith.constant 0 : i32
    return %c0_i32, %c0_i32_0 : i32, i32
  }
  func.func @transform_7(%arg0: i32) -> (i32, i32) {
    %c0_i32 = arith.constant 0 : i32
    %c0_i32_0 = arith.constant 0 : i32
    return %arg0, %c0_i32 : i32, i32
  }
  func.func @transform_8(%arg0: i32) -> (i32, i32) {
    %c0_i32 = arith.constant 0 : i32
    %c0_i32_0 = arith.constant 0 : i32
    return %c0_i32, %arg0 : i32, i32
  }
}

</mosaic_0001>

<llo_original>
// kernel: classifier_forward.1
$region0: #{classifier_forward.1}
  #allocation0 [shape = 'u32[]', space=smem, size = 0x4, offset = 0x4, fixed_abs, tag = 'smem constant byte address 0x4 - core index']
  #allocation1 [shape = 'u32[72,128]{1,0:T(1,128)}', space=vmem, size = 0x9000, scoped, tag = 'internal scratch']
  %s0 = inlined_call_operand.vmem [shape: f32[16,1024], index: 0, kind: input, shape index: {}]
  %s1 = inlined_call_operand.vmem [shape: bf16[1024,128], index: 1, kind: input, shape index: {}]
  %s2 = inlined_call_operand.vmem [shape: f32[1,128], index: 2, kind: input, shape index: {}]
  %s3 = inlined_call_operand.vmem [shape: bf16[128,128], index: 3, kind: input, shape index: {}]
  %s4 = inlined_call_operand.vmem [shape: f32[1,128], index: 4, kind: input, shape index: {}]
  %s5 = inlined_call_operand.vmem [shape: bf16[128,128], index: 5, kind: input, shape index: {}]
  %s6 = inlined_call_operand.vmem [shape: f32[1,128], index: 6, kind: input, shape index: {}]
  %s7 = inlined_call_operand.vmem [shape: bf16[16,128], index: 7, kind: output, shape index: {0}]
  %s8 = inlined_call_operand.vmem [shape: f32[1,256], index: 8, kind: output, shape index: {1}]
  %9 = xla_tuple %s7, %s8
  %s10 = sld [smem:[#allocation0]]
  $region69: #{classifier_forward.1} parent=0
    _
  %s12 = ssub.s32 1, %s10
  %s13 = scalar_select 0, %s12, %s10
  loop: start=0, step=1, limit=4
  $region2: #{classifier_forward.1} parent=0 // loop_pre_header
    _
  $region3: #{classifier_forward.1} parent=0 // loop_header
    %s15 = sphi 0, %s19
    %p16 = scmp.ge.s32.totalorder %s15, 4
    %s25 = sphi 0, %s27
    %s28 = sphi 0, %s25
    %s29 = sphi 0, %s28
    %s45 = sphi 0, %s29
    %s49 = sphi 0, %s49
    %s51 = sphi 0, %s49
    %s52 = sphi 0, %s51
    %s66 = sphi 0, %s52
    %s70 = sphi 0, %s70
    %s72 = sphi 0, %s70
    %s73 = sphi 0, %s72
    %s87 = sphi 0, %s73
    %s91 = sphi 0, %s91
    %s93 = sphi 0, %s91
    %s94 = sphi 0, %s93
    %s108 = sphi 0, %s94
    %s112 = sphi 0, %s112
    %s114 = sphi 0, %s112
    %s115 = sphi 0, %s114
    %s129 = sphi 0, %s115
    %s133 = sphi 0, %s133
    %s135 = sphi 0, %s133
    %s136 = sphi 0, %s135
    %s150 = sphi 0, %s136
    %s154 = sphi 0, %s154
    %s156 = sphi 0, %s154
    %s157 = sphi 0, %s156
    %s171 = sphi 0, %s157
    %s177 = sphi 0, %s179
    %s180 = sphi 0, %s177
    %s181 = sphi 0, %s180
    %s197 = sphi 0, %s181
    %s203 = sphi 0, %s205
    %s206 = sphi 0, %s203
    %s207 = sphi 0, %s206
    %s223 = sphi 0, %s207
  $region4: #{classifier_forward.1} parent=0 // loop_header_branch
    %18 = sbr.rel (%p16) target = $region8
  $region5: #{classifier_forward.1} parent=0 // loop_body
    %s20 = ssub.s32 %s15, 1
    %s21 = ssub.s32 %s15, 2
    %s22 = sadd.s32 %s15, 1
    %s23 = ssub.s32 %s15, %s22
    %p24 = scmp.eq.s32.totalorder %s23, 0
    %s26 = sadd.s32 %s25, 1
    %s27 = scalar_select %p24, %s25, %s26
    %p30 = pneg %p24
    %p31 = scmp.eq.s32.totalorder %s15, 1
    %p32 = por %p30, %p31
    %p33 = scmp.ne.s32.totalorder %s25, %s28
    %p34 = scmp.eq.s32.totalorder %s15, 0
    %p35 = por %p33, %p34
    %p36 = scmp.ne.s32.totalorder %s25, %s28
    %p37 = scmp.eq.s32.totalorder %s20, 1
    %p38 = por %p36, %p37
    %p39 = scmp.ne.s32.totalorder %s28, %s29
    %p40 = scmp.eq.s32.totalorder %s20, 0
    %p41 = por %p39, %p40
    %p42 = scmp.ne.s32.totalorder %s28, %s29
    %p43 = scmp.eq.s32.totalorder %s21, 1
    %p44 = por %p42, %p43
    %p46 = scmp.ne.s32.totalorder %s29, %s45
    %p47 = scmp.eq.s32.totalorder %s21, 0
    %p48 = por %p46, %p47
    %s50 = sadd.s32 %s49, 1
    %p53 = scmp.eq.s32.totalorder %s15, 1
    %p54 = scmp.ne.s32.totalorder %s49, %s51
    %p55 = scmp.eq.s32.totalorder %s15, 0
    %p56 = por %p54, %p55
    %p57 = scmp.ne.s32.totalorder %s49, %s51
    %p58 = scmp.eq.s32.totalorder %s20, 1
    %p59 = por %p57, %p58
    %p60 = scmp.ne.s32.totalorder %s51, %s52
    %p61 = scmp.eq.s32.totalorder %s20, 0
    %p62 = por %p60, %p61
    %p63 = scmp.ne.s32.totalorder %s51, %s52
    %p64 = scmp.eq.s32.totalorder %s21, 1
    %p65 = por %p63, %p64
    %p67 = scmp.ne.s32.totalorder %s52, %s66
    %p68 = scmp.eq.s32.totalorder %s21, 0
    %p69 = por %p67, %p68
    %s71 = sadd.s32 %s70, 1
    %p74 = scmp.eq.s32.totalorder %s15, 1
    %p75 = scmp.ne.s32.totalorder %s70, %s72
    %p76 = scmp.eq.s32.totalorder %s15, 0
    %p77 = por %p75, %p76
    %p78 = scmp.ne.s32.totalorder %s70, %s72
    %p79 = scmp.eq.s32.totalorder %s20, 1
    %p80 = por %p78, %p79
    %p81 = scmp.ne.s32.totalorder %s72, %s73
    %p82 = scmp.eq.s32.totalorder %s20, 0
    %p83 = por %p81, %p82
    %p84 = scmp.ne.s32.totalorder %s72, %s73
    %p85 = scmp.eq.s32.totalorder %s21, 1
    %p86 = por %p84, %p85
    %p88 = scmp.ne.s32.totalorder %s73, %s87
    %p89 = scmp.eq.s32.totalorder %s21, 0
    %p90 = por %p88, %p89
    %s92 = sadd.s32 %s91, 1
    %p95 = scmp.eq.s32.totalorder %s15, 1
    %p96 = scmp.ne.s32.totalorder %s91, %s93
    %p97 = scmp.eq.s32.totalorder %s15, 0
    %p98 = por %p96, %p97
    %p99 = scmp.ne.s32.totalorder %s91, %s93
    %p100 = scmp.eq.s32.totalorder %s20, 1
    %p101 = por %p99, %p100
    %p102 = scmp.ne.s32.totalorder %s93, %s94
    %p103 = scmp.eq.s32.totalorder %s20, 0
    %p104 = por %p102, %p103
    %p105 = scmp.ne.s32.totalorder %s93, %s94
    %p106 = scmp.eq.s32.totalorder %s21, 1
    %p107 = por %p105, %p106
    %p109 = scmp.ne.s32.totalorder %s94, %s108
    %p110 = scmp.eq.s32.totalorder %s21, 0
    %p111 = por %p109, %p110
    %s113 = sadd.s32 %s112, 1
    %p116 = scmp.eq.s32.totalorder %s15, 1
    %p117 = scmp.ne.s32.totalorder %s112, %s114
    %p118 = scmp.eq.s32.totalorder %s15, 0
    %p119 = por %p117, %p118
    %p120 = scmp.ne.s32.totalorder %s112, %s114
    %p121 = scmp.eq.s32.totalorder %s20, 1
    %p122 = por %p120, %p121
    %p123 = scmp.ne.s32.totalorder %s114, %s115
    %p124 = scmp.eq.s32.totalorder %s20, 0
    %p125 = por %p123, %p124
    %p126 = scmp.ne.s32.totalorder %s114, %s115
    %p127 = scmp.eq.s32.totalorder %s21, 1
    %p128 = por %p126, %p127
    %p130 = scmp.ne.s32.totalorder %s115, %s129
    %p131 = scmp.eq.s32.totalorder %s21, 0
    %p132 = por %p130, %p131
    %s134 = sadd.s32 %s133, 1
    %p137 = scmp.eq.s32.totalorder %s15, 1
    %p138 = scmp.ne.s32.totalorder %s133, %s135
    %p139 = scmp.eq.s32.totalorder %s15, 0
    %p140 = por %p138, %p139
    %p141 = scmp.ne.s32.totalorder %s133, %s135
    %p142 = scmp.eq.s32.totalorder %s20, 1
    %p143 = por %p141, %p142
    %p144 = scmp.ne.s32.totalorder %s135, %s136
    %p145 = scmp.eq.s32.totalorder %s20, 0
    %p146 = por %p144, %p145
    %p147 = scmp.ne.s32.totalorder %s135, %s136
    %p148 = scmp.eq.s32.totalorder %s21, 1
    %p149 = por %p147, %p148
    %p151 = scmp.ne.s32.totalorder %s136, %s150
    %p152 = scmp.eq.s32.totalorder %s21, 0
    %p153 = por %p151, %p152
    %s155 = sadd.s32 %s154, 1
    %p158 = scmp.eq.s32.totalorder %s15, 1
    %p159 = scmp.ne.s32.totalorder %s154, %s156
    %p160 = scmp.eq.s32.totalorder %s15, 0
    %p161 = por %p159, %p160
    %p162 = scmp.ne.s32.totalorder %s154, %s156
    %p163 = scmp.eq.s32.totalorder %s20, 1
    %p164 = por %p162, %p163
    %p165 = scmp.ne.s32.totalorder %s156, %s157
    %p166 = scmp.eq.s32.totalorder %s20, 0
    %p167 = por %p165, %p166
    %p168 = scmp.ne.s32.totalorder %s156, %s157
    %p169 = scmp.eq.s32.totalorder %s21, 1
    %p170 = por %p168, %p169
    %p172 = scmp.ne.s32.totalorder %s157, %s171
    %p173 = scmp.eq.s32.totalorder %s21, 0
    %p174 = por %p172, %p173
    %s175 = ssub.s32 %s15, %s22
    %p176 = scmp.eq.s32.totalorder %s175, 0
    %s178 = sadd.s32 %s177, 1
    %s179 = scalar_select %p176, %s177, %s178
    %p182 = pneg %p176
    %p183 = scmp.eq.s32.totalorder %s15, 1
    %p184 = por %p182, %p183
    %p185 = scmp.ne.s32.totalorder %s177, %s180
    %p186 = scmp.eq.s32.totalorder %s15, 0
    %p187 = por %p185, %p186
    %p188 = scmp.ne.s32.totalorder %s177, %s180
    %p189 = scmp.eq.s32.totalorder %s20, 1
    %p190 = por %p188, %p189
    %p191 = scmp.ne.s32.totalorder %s180, %s181
    %p192 = scmp.eq.s32.totalorder %s20, 0
    %p193 = por %p191, %p192
    %p194 = scmp.ne.s32.totalorder %s180, %s181
    %p195 = scmp.eq.s32.totalorder %s21, 1
    %p196 = por %p194, %p195
    %p198 = scmp.ne.s32.totalorder %s181, %s197
    %p199 = scmp.eq.s32.totalorder %s21, 0
    %p200 = por %p198, %p199
    %s201 = ssub.s32 %s15, %s22
    %p202 = scmp.eq.s32.totalorder %s201, 0
    %s204 = sadd.s32 %s203, 1
    %s205 = scalar_select %p202, %s203, %s204
    %p208 = pneg %p202
    %p209 = scmp.eq.s32.totalorder %s15, 1
    %p210 = por %p208, %p209
    %p211 = scmp.ne.s32.totalorder %s203, %s206
    %p212 = scmp.eq.s32.totalorder %s15, 0
    %p213 = por %p211, %p212
    %p214 = scmp.ne.s32.totalorder %s203, %s206
    %p215 = scmp.eq.s32.totalorder %s20, 1
    %p216 = por %p214, %p215
    %p217 = scmp.ne.s32.totalorder %s206, %s207
    %p218 = scmp.eq.s32.totalorder %s20, 0
    %p219 = por %p217, %p218
    %p220 = scmp.ne.s32.totalorder %s206, %s207
    %p221 = scmp.eq.s32.totalorder %s21, 1
    %p222 = por %p220, %p221
    %p224 = scmp.ne.s32.totalorder %s207, %s223
    %p225 = scmp.eq.s32.totalorder %s21, 0
    %p226 = por %p224, %p225
    %p227 = scmp.le.s32.totalorder 1, %s15
    %p228 = scmp.lt.s32.totalorder %s15, 3
    %p229 = pnand %p227, %p228
    %p230 = pneg %p229
    // Predicated region
    $region9: #{classifier_forward.1} parent=5 // pred_check
      _
    $region10: #{classifier_forward.1} parent=5 // pred_check_branch
      %232 = sbr.rel (%p229) target = $region12
    $region11: #{classifier_forward.1} parent=5 // pred_region
      %s233 = ssub.s32 %s15, 1
      // Predicated region
      $region13: #{classifier_forward.1} parent=11 // pred_check
        %p234 = pneg %p62
      $region14: #{classifier_forward.1} parent=11 // pred_check_branch
        %236 = sbr.rel (%p234) target = $region16
      $region15: #{classifier_forward.1} parent=11 // pred_region
        _
      $region16: #{classifier_forward.1} parent=11 // pred_fallthru
        _
      // Predicated region
      $region17: #{classifier_forward.1} parent=11 // pred_check
        %p237 = pneg %p83
      $region18: #{classifier_forward.1} parent=11 // pred_check_branch
        %239 = sbr.rel (%p237) target = $region20
      $region19: #{classifier_forward.1} parent=11 // pred_region
        _
      $region20: #{classifier_forward.1} parent=11 // pred_fallthru
        _
      // Predicated region
      $region21: #{classifier_forward.1} parent=11 // pred_check
        %p240 = pneg %p104
      $region22: #{classifier_forward.1} parent=11 // pred_check_branch
        %242 = sbr.rel (%p240) target = $region24
      $region23: #{classifier_forward.1} parent=11 // pred_region
        _
      $region24: #{classifier_forward.1} parent=11 // pred_fallthru
        _
      // Predicated region
      $region25: #{classifier_forward.1} parent=11 // pred_check
        %p243 = pneg %p125
      $region26: #{classifier_forward.1} parent=11 // pred_check_branch
        %245 = sbr.rel (%p243) target = $region28
      $region27: #{classifier_forward.1} parent=11 // pred_region
        _
      $region28: #{classifier_forward.1} parent=11 // pred_fallthru
        _
      // Predicated region
      $region29: #{classifier_forward.1} parent=11 // pred_check
        %p246 = pneg %p146
      $region30: #{classifier_forward.1} parent=11 // pred_check_branch
        %248 = sbr.rel (%p246) target = $region32
      $region31: #{classifier_forward.1} parent=11 // pred_region
        _
      $region32: #{classifier_forward.1} parent=11 // pred_fallthru
        _
      // Predicated region
      $region33: #{classifier_forward.1} parent=11 // pred_check
        %p249 = pneg %p167
      $region34: #{classifier_forward.1} parent=11 // pred_check_branch
        %251 = sbr.rel (%p249) target = $region36
      $region35: #{classifier_forward.1} parent=11 // pred_region
        _
      $region36: #{classifier_forward.1} parent=11 // pred_fallthru
        _
    $region12: #{classifier_forward.1} parent=5 // pred_fallthru
      _
    %p252 = scmp.lt.s32.totalorder %s15, 2
    // Predicated region
    $region37: #{classifier_forward.1} parent=5 // pred_check
      %p253 = pneg %p252
    $region38: #{classifier_forward.1} parent=5 // pred_check_branch
      %255 = sbr.rel (%p253) target = $region40
    $region39: #{classifier_forward.1} parent=5 // pred_region
      // Predicated region
      $region41: #{classifier_forward.1} parent=39 // pred_check
        %p256 = pneg %p35
      $region42: #{classifier_forward.1} parent=39 // pred_check_branch
        %258 = sbr.rel (%p256) target = $region44
      $region43: #{classifier_forward.1} parent=39 // pred_region
        %p259 = scmp.lt.s32.totalorder %s15, 1
        %s260 = scalar_select %p259, %s15, 1
        %s261 = smul.addr %s260, 8
        %s262 = smul.addr %s261, 8
        %s263 = scalar_lea.vmem %s0, %s262
      $region44: #{classifier_forward.1} parent=39 // pred_fallthru
        _
    $region40: #{classifier_forward.1} parent=5 // pred_fallthru
      _
    %p264 = scmp.le.s32.totalorder 1, %s15
    %p265 = scmp.lt.s32.totalorder %s15, 3
    %p266 = pnand %p264, %p265
    %p267 = pneg %p266
    // Predicated region
    $region45: #{classifier_forward.1} parent=5 // pred_check
      _
    $region46: #{classifier_forward.1} parent=5 // pred_check_branch
      %269 = sbr.rel (%p266) target = $region48
    $region47: #{classifier_forward.1} parent=5 // pred_region
      %s270 = ssub.s32 %s15, 1
      %p271 = scmp.lt.s32.totalorder %s20, 1
      %s272 = scalar_select %p271, %s20, 1
      %s273 = smul.addr %s272, 8
      %s274 = smul.addr %s273, 8
      %s275 = scalar_lea.vmem %s0, %s274
      %p276 = pneg %p41
      %p277 = pneg %p38
      %p278 = pneg %p62
      %p279 = pneg %p59
      %p280 = pneg %p83
      %p281 = pneg %p80
      %p282 = pneg %p104
      %p283 = pneg %p101
      %p284 = pneg %p125
      %p285 = pneg %p122
      %p286 = pneg %p146
      %p287 = pneg %p143
      %p288 = pneg %p167
      %p289 = pneg %p164
      %p290 = pneg %p193
      %p291 = pneg %p190
      %p292 = scmp.lt.s32.totalorder %s20, 1
      %s293 = scalar_select %p292, %s20, 1
      %s294 = smul.addr %s293, 4
      %s295 = scalar_lea.vmem %s7, %s294
      %p296 = pneg %p219
      %p297 = pneg %p216
      %p298 = scmp.lt.s32.totalorder %s20, 1
      %s299 = scalar_select %p298, %s20, 1
      %s300 = scalar_lea.vmem %s8, %s299
      %p301 = scmp.lt.s32.totalorder %s20, 1
      %s302 = scalar_select %p301, %s20, 1
      %s303 = smul.addr %s302, 8
      %s304 = smul.addr %s303, 8
      %s305 = scalar_lea.vmem %s0, %s304
      %p306 = scmp.lt.s32.totalorder %s20, 1
      %s307 = scalar_select %p306, %s20, 1
      %s308 = smul.addr %s307, 4
      %s309 = scalar_lea.vmem %s7, %s308
      %p310 = scmp.lt.s32.totalorder %s20, 1
      %s311 = scalar_select %p310, %s20, 1
      %s312 = scalar_lea.vmem %s8, %s311
      %v313 = vld [vmem:[%s305] sm:$0xff]
      %v314 = vld [vmem:[%s305 + $0x8] sm:$0xff]
      %v315 = vld [vmem:[%s305 + $0x10] sm:$0xff]
      %v316 = vld [vmem:[%s305 + $0x18] sm:$0xff]
      %v317 = vld [vmem:[%s305 + $0x20] sm:$0xff]
      %v318 = vld [vmem:[%s305 + $0x28] sm:$0xff]
      %v319 = vld [vmem:[%s305 + $0x30] sm:$0xff]
      %v320 = vld [vmem:[%s305 + $0x38] sm:$0xff]
      %v321 = vpack.c.bf16 %v313, %v313
      %v322 = vpack.c.bf16 %v314, %v314
      %v323 = vpack.c.bf16 %v315, %v315
      %v324 = vpack.c.bf16 %v316, %v316
      %v325 = vpack.c.bf16 %v317, %v317
      %v326 = vpack.c.bf16 %v318, %v318
      %v327 = vpack.c.bf16 %v319, %v319
      %v328 = vpack.c.bf16 %v320, %v320
      %v329 = vld [vmem:[%s1] sm:$0xf]
      %v330 = vld [vmem:[%s1 + $0x4] sm:$0xf]
      %v331 = vld [vmem:[%s1 + $0x8] sm:$0xf]
      %v332 = vld [vmem:[%s1 + $0xc] sm:$0xf]
      %v333 = vld [vmem:[%s1 + $0x10] sm:$0xf]
      %v334 = vld [vmem:[%s1 + $0x14] sm:$0xf]
      %v335 = vld [vmem:[%s1 + $0x18] sm:$0xf]
      %v336 = vld [vmem:[%s1 + $0x1c] sm:$0xf]
      %v337 = vld [vmem:[%s1 + $0x20] sm:$0xf]
      %v338 = vld [vmem:[%s1 + $0x24] sm:$0xf]
      %v339 = vld [vmem:[%s1 + $0x28] sm:$0xf]
      %v340 = vld [vmem:[%s1 + $0x2c] sm:$0xf]
      %v341 = vld [vmem:[%s1 + $0x30] sm:$0xf]
      %v342 = vld [vmem:[%s1 + $0x34] sm:$0xf]
      %v343 = vld [vmem:[%s1 + $0x38] sm:$0xf]
      %v344 = vld [vmem:[%s1 + $0x3c] sm:$0xf]
      %v345 = vld [vmem:[%s1 + $0x40] sm:$0xf]
      %v346 = vld [vmem:[%s1 + $0x44] sm:$0xf]
      %v347 = vld [vmem:[%s1 + $0x48] sm:$0xf]
      %v348 = vld [vmem:[%s1 + $0x4c] sm:$0xf]
      %v349 = vld [vmem:[%s1 + $0x50] sm:$0xf]
      %v350 = vld [vmem:[%s1 + $0x54] sm:$0xf]
      %v351 = vld [vmem:[%s1 + $0x58] sm:$0xf]
      %v352 = vld [vmem:[%s1 + $0x5c] sm:$0xf]
      %v353 = vld [vmem:[%s1 + $0x60] sm:$0xf]
      %v354 = vld [vmem:[%s1 + $0x64] sm:$0xf]
      %v355 = vld [vmem:[%s1 + $0x68] sm:$0xf]
      %v356 = vld [vmem:[%s1 + $0x6c] sm:$0xf]
      %v357 = vld [vmem:[%s1 + $0x70] sm:$0xf]
      %v358 = vld [vmem:[%s1 + $0x74] sm:$0xf]
      %v359 = vld [vmem:[%s1 + $0x78] sm:$0xf]
      %v360 = vld [vmem:[%s1 + $0x7c] sm:$0xf]
      %v361 = vld [vmem:[%s1 + $0x80] sm:$0xf]
      %v362 = vld [vmem:[%s1 + $0x84] sm:$0xf]
      %v363 = vld [vmem:[%s1 + $0x88] sm:$0xf]
      %v364 = vld [vmem:[%s1 + $0x8c] sm:$0xf]
      %v365 = vld [vmem:[%s1 + $0x90] sm:$0xf]
      %v366 = vld [vmem:[%s1 + $0x94] sm:$0xf]
      %v367 = vld [vmem:[%s1 + $0x98] sm:$0xf]
      %v368 = vld [vmem:[%s1 + $0x9c] sm:$0xf]
      %v369 = vld [vmem:[%s1 + $0xa0] sm:$0xf]
      %v370 = vld [vmem:[%s1 + $0xa4] sm:$0xf]
      %v371 = vld [vmem:[%s1 + $0xa8] sm:$0xf]
      %v372 = vld [vmem:[%s1 + $0xac] sm:$0xf]
      %v373 = vld [vmem:[%s1 + $0xb0] sm:$0xf]
      %v374 = vld [vmem:[%s1 + $0xb4] sm:$0xf]
      %v375 = vld [vmem:[%s1 + $0xb8] sm:$0xf]
      %v376 = vld [vmem:[%s1 + $0xbc] sm:$0xf]
      %v377 = vld [vmem:[%s1 + $0xc0] sm:$0xf]
      %v378 = vld [vmem:[%s1 + $0xc4] sm:$0xf]
      %v379 = vld [vmem:[%s1 + $0xc8] sm:$0xf]
      %v380 = vld [vmem:[%s1 + $0xcc] sm:$0xf]
      %v381 = vld [vmem:[%s1 + $0xd0] sm:$0xf]
      %v382 = vld [vmem:[%s1 + $0xd4] sm:$0xf]
      %v383 = vld [vmem:[%s1 + $0xd8] sm:$0xf]
      %v384 = vld [vmem:[%s1 + $0xdc] sm:$0xf]
      %v385 = vld [vmem:[%s1 + $0xe0] sm:$0xf]
      %v386 = vld [vmem:[%s1 + $0xe4] sm:$0xf]
      %v387 = vld [vmem:[%s1 + $0xe8] sm:$0xf]
      %v388 = vld [vmem:[%s1 + $0xec] sm:$0xf]
      %v389 = vld [vmem:[%s1 + $0xf0] sm:$0xf]
      %v390 = vld [vmem:[%s1 + $0xf4] sm:$0xf]
      %v391 = vld [vmem:[%s1 + $0xf8] sm:$0xf]
      %v392 = vld [vmem:[%s1 + $0xfc] sm:$0xf]
      %v393 = vld [vmem:[%s1 + $0x100] sm:$0xf]
      %v394 = vld [vmem:[%s1 + $0x104] sm:$0xf]
      %v395 = vld [vmem:[%s1 + $0x108] sm:$0xf]
      %v396 = vld [vmem:[%s1 + $0x10c] sm:$0xf]
      %v397 = vld [vmem:[%s1 + $0x110] sm:$0xf]
      %v398 = vld [vmem:[%s1 + $0x114] sm:$0xf]
      %v399 = vld [vmem:[%s1 + $0x118] sm:$0xf]
      %v400 = vld [vmem:[%s1 + $0x11c] sm:$0xf]
      %v401 = vld [vmem:[%s1 + $0x120] sm:$0xf]
      %v402 = vld [vmem:[%s1 + $0x124] sm:$0xf]
      %v403 = vld [vmem:[%s1 + $0x128] sm:$0xf]
      %v404 = vld [vmem:[%s1 + $0x12c] sm:$0xf]
      %v405 = vld [vmem:[%s1 + $0x130] sm:$0xf]
      %v406 = vld [vmem:[%s1 + $0x134] sm:$0xf]
      %v407 = vld [vmem:[%s1 + $0x138] sm:$0xf]
      %v408 = vld [vmem:[%s1 + $0x13c] sm:$0xf]
      %v409 = vld [vmem:[%s1 + $0x140] sm:$0xf]
      %v410 = vld [vmem:[%s1 + $0x144] sm:$0xf]
      %v411 = vld [vmem:[%s1 + $0x148] sm:$0xf]
      %v412 = vld [vmem:[%s1 + $0x14c] sm:$0xf]
      %v413 = vld [vmem:[%s1 + $0x150] sm:$0xf]
      %v414 = vld [vmem:[%s1 + $0x154] sm:$0xf]
      %v415 = vld [vmem:[%s1 + $0x158] sm:$0xf]
      %v416 = vld [vmem:[%s1 + $0x15c] sm:$0xf]
      %v417 = vld [vmem:[%s1 + $0x160] sm:$0xf]
      %v418 = vld [vmem:[%s1 + $0x164] sm:$0xf]
      %v419 = vld [vmem:[%s1 + $0x168] sm:$0xf]
      %v420 = vld [vmem:[%s1 + $0x16c] sm:$0xf]
      %v421 = vld [vmem:[%s1 + $0x170] sm:$0xf]
      %v422 = vld [vmem:[%s1 + $0x174] sm:$0xf]
      %v423 = vld [vmem:[%s1 + $0x178] sm:$0xf]
      %v424 = vld [vmem:[%s1 + $0x17c] sm:$0xf]
      %v425 = vld [vmem:[%s1 + $0x180] sm:$0xf]
      %v426 = vld [vmem:[%s1 + $0x184] sm:$0xf]
      %v427 = vld [vmem:[%s1 + $0x188] sm:$0xf]
      %v428 = vld [vmem:[%s1 + $0x18c] sm:$0xf]
      %v429 = vld [vmem:[%s1 + $0x190] sm:$0xf]
      %v430 = vld [vmem:[%s1 + $0x194] sm:$0xf]
      %v431 = vld [vmem:[%s1 + $0x198] sm:$0xf]
      %v432 = vld [vmem:[%s1 + $0x19c] sm:$0xf]
      %v433 = vld [vmem:[%s1 + $0x1a0] sm:$0xf]
      %v434 = vld [vmem:[%s1 + $0x1a4] sm:$0xf]
      %v435 = vld [vmem:[%s1 + $0x1a8] sm:$0xf]
      %v436 = vld [vmem:[%s1 + $0x1ac] sm:$0xf]
      %v437 = vld [vmem:[%s1 + $0x1b0] sm:$0xf]
      %v438 = vld [vmem:[%s1 + $0x1b4] sm:$0xf]
      %v439 = vld [vmem:[%s1 + $0x1b8] sm:$0xf]
      %v440 = vld [vmem:[%s1 + $0x1bc] sm:$0xf]
      %v441 = vld [vmem:[%s1 + $0x1c0] sm:$0xf]
      %v442 = vld [vmem:[%s1 + $0x1c4] sm:$0xf]
      %v443 = vld [vmem:[%s1 + $0x1c8] sm:$0xf]
      %v444 = vld [vmem:[%s1 + $0x1cc] sm:$0xf]
      %v445 = vld [vmem:[%s1 + $0x1d0] sm:$0xf]
      %v446 = vld [vmem:[%s1 + $0x1d4] sm:$0xf]
      %v447 = vld [vmem:[%s1 + $0x1d8] sm:$0xf]
      %v448 = vld [vmem:[%s1 + $0x1dc] sm:$0xf]
      %v449 = vld [vmem:[%s1 + $0x1e0] sm:$0xf]
      %v450 = vld [vmem:[%s1 + $0x1e4] sm:$0xf]
      %v451 = vld [vmem:[%s1 + $0x1e8] sm:$0xf]
      %v452 = vld [vmem:[%s1 + $0x1ec] sm:$0xf]
      %v453 = vld [vmem:[%s1 + $0x1f0] sm:$0xf]
      %v454 = vld [vmem:[%s1 + $0x1f4] sm:$0xf]
      %v455 = vld [vmem:[%s1 + $0x1f8] sm:$0xf]
      %v456 = vld [vmem:[%s1 + $0x1fc] sm:$0xf]
      %v457 = vld [vmem:[%s2] sm:$0x1]
      %v459 = vperm.slane %v457, 0
      %v589 = vunpack.c.l.b16 %v329
      %v590 = vunpack.c.l.b16 %v330
      %v591 = vunpack.c.l.b16 %v331
      %v592 = vunpack.c.l.b16 %v332
      %v593 = vunpack.c.l.b16 %v333
      %v594 = vunpack.c.l.b16 %v334
      %v595 = vunpack.c.l.b16 %v335
      %v596 = vunpack.c.l.b16 %v336
      %v597 = vunpack.c.l.b16 %v337
      %v598 = vunpack.c.l.b16 %v338
      %v599 = vunpack.c.l.b16 %v339
      %v600 = vunpack.c.l.b16 %v340
      %v601 = vunpack.c.l.b16 %v341
      %v602 = vunpack.c.l.b16 %v342
      %v603 = vunpack.c.l.b16 %v343
      %v604 = vunpack.c.l.b16 %v344
      %v605 = vunpack.c.l.b16 %v345
      %v606 = vunpack.c.l.b16 %v346
      %v607 = vunpack.c.l.b16 %v347
      %v608 = vunpack.c.l.b16 %v348
      %v609 = vunpack.c.l.b16 %v349
      %v610 = vunpack.c.l.b16 %v350
      %v611 = vunpack.c.l.b16 %v351
      %v612 = vunpack.c.l.b16 %v352
      %v613 = vunpack.c.l.b16 %v353
      %v614 = vunpack.c.l.b16 %v354
      %v615 = vunpack.c.l.b16 %v355
      %v616 = vunpack.c.l.b16 %v356
      %v617 = vunpack.c.l.b16 %v357
      %v618 = vunpack.c.l.b16 %v358
      %v619 = vunpack.c.l.b16 %v359
      %v620 = vunpack.c.l.b16 %v360
      %v621 = vunpack.c.l.b16 %v361
      %v622 = vunpack.c.l.b16 %v362
      %v623 = vunpack.c.l.b16 %v363
      %v624 = vunpack.c.l.b16 %v364
      %v625 = vunpack.c.l.b16 %v365
      %v626 = vunpack.c.l.b16 %v366
      %v627 = vunpack.c.l.b16 %v367
      %v628 = vunpack.c.l.b16 %v368
      %v629 = vunpack.c.l.b16 %v369
      %v630 = vunpack.c.l.b16 %v370
      %v631 = vunpack.c.l.b16 %v371
      %v632 = vunpack.c.l.b16 %v372
      %v633 = vunpack.c.l.b16 %v373
      %v634 = vunpack.c.l.b16 %v374
      %v635 = vunpack.c.l.b16 %v375
      %v636 = vunpack.c.l.b16 %v376
      %v637 = vunpack.c.l.b16 %v377
      %v638 = vunpack.c.l.b16 %v378
      %v639 = vunpack.c.l.b16 %v379
      %v640 = vunpack.c.l.b16 %v380
      %v641 = vunpack.c.l.b16 %v381
      %v642 = vunpack.c.l.b16 %v382
      %v643 = vunpack.c.l.b16 %v383
      %v644 = vunpack.c.l.b16 %v384
      %v645 = vunpack.c.l.b16 %v385
      %v646 = vunpack.c.l.b16 %v386
      %v647 = vunpack.c.l.b16 %v387
      %v648 = vunpack.c.l.b16 %v388
      %v649 = vunpack.c.l.b16 %v389
      %v650 = vunpack.c.l.b16 %v390
      %v651 = vunpack.c.l.b16 %v391
      %v652 = vunpack.c.l.b16 %v392
      %v653 = vunpack.c.l.b16 %v393
      %v654 = vunpack.c.l.b16 %v394
      %v655 = vunpack.c.l.b16 %v395
      %v656 = vunpack.c.l.b16 %v396
      %v657 = vunpack.c.l.b16 %v397
      %v658 = vunpack.c.l.b16 %v398
      %v659 = vunpack.c.l.b16 %v399
      %v660 = vunpack.c.l.b16 %v400
      %v661 = vunpack.c.l.b16 %v401
      %v662 = vunpack.c.l.b16 %v402
      %v663 = vunpack.c.l.b16 %v403
      %v664 = vunpack.c.l.b16 %v404
      %v665 = vunpack.c.l.b16 %v405
      %v666 = vunpack.c.l.b16 %v406
      %v667 = vunpack.c.l.b16 %v407
      %v668 = vunpack.c.l.b16 %v408
      %v669 = vunpack.c.l.b16 %v409
      %v670 = vunpack.c.l.b16 %v410
      %v671 = vunpack.c.l.b16 %v411
      %v672 = vunpack.c.l.b16 %v412
      %v673 = vunpack.c.l.b16 %v413
      %v674 = vunpack.c.l.b16 %v414
      %v675 = vunpack.c.l.b16 %v415
      %v676 = vunpack.c.l.b16 %v416
      %v677 = vunpack.c.l.b16 %v417
      %v678 = vunpack.c.l.b16 %v418
      %v679 = vunpack.c.l.b16 %v419
      %v680 = vunpack.c.l.b16 %v420
      %v681 = vunpack.c.l.b16 %v421
      %v682 = vunpack.c.l.b16 %v422
      %v683 = vunpack.c.l.b16 %v423
      %v684 = vunpack.c.l.b16 %v424
      %v685 = vunpack.c.l.b16 %v425
      %v686 = vunpack.c.l.b16 %v426
      %v687 = vunpack.c.l.b16 %v427
      %v688 = vunpack.c.l.b16 %v428
      %v689 = vunpack.c.l.b16 %v429
      %v690 = vunpack.c.l.b16 %v430
      %v691 = vunpack.c.l.b16 %v431
      %v692 = vunpack.c.l.b16 %v432
      %v693 = vunpack.c.l.b16 %v433
      %v694 = vunpack.c.l.b16 %v434
      %v695 = vunpack.c.l.b16 %v435
      %v696 = vunpack.c.l.b16 %v436
      %v697 = vunpack.c.l.b16 %v437
      %v698 = vunpack.c.l.b16 %v438
      %v699 = vunpack.c.l.b16 %v439
      %v700 = vunpack.c.l.b16 %v440
      %v701 = vunpack.c.l.b16 %v441
      %v702 = vunpack.c.l.b16 %v442
      %v703 = vunpack.c.l.b16 %v443
      %v704 = vunpack.c.l.b16 %v444
      %v705 = vunpack.c.l.b16 %v445
      %v706 = vunpack.c.l.b16 %v446
      %v707 = vunpack.c.l.b16 %v447
      %v708 = vunpack.c.l.b16 %v448
      %v709 = vunpack.c.l.b16 %v449
      %v710 = vunpack.c.l.b16 %v450
      %v711 = vunpack.c.l.b16 %v451
      %v712 = vunpack.c.l.b16 %v452
      %v713 = vunpack.c.l.b16 %v453
      %v714 = vunpack.c.l.b16 %v454
      %v715 = vunpack.c.l.b16 %v455
      %v716 = vunpack.c.l.b16 %v456
      %v717 = vpack.c.b16 %v590, %v589
      %v718 = vpack.c.b16 %v592, %v591
      %v719 = vpack.c.b16 %v594, %v593
      %v720 = vpack.c.b16 %v596, %v595
      %v721 = vpack.c.b16 %v598, %v597
      %v722 = vpack.c.b16 %v600, %v599
      %v723 = vpack.c.b16 %v602, %v601
      %v724 = vpack.c.b16 %v604, %v603
      %v725 = vpack.c.b16 %v606, %v605
      %v726 = vpack.c.b16 %v608, %v607
      %v727 = vpack.c.b16 %v610, %v609
      %v728 = vpack.c.b16 %v612, %v611
      %v729 = vpack.c.b16 %v614, %v613
      %v730 = vpack.c.b16 %v616, %v615
      %v731 = vpack.c.b16 %v618, %v617
      %v732 = vpack.c.b16 %v620, %v619
      %v733 = vpack.c.b16 %v622, %v621
      %v734 = vpack.c.b16 %v624, %v623
      %v735 = vpack.c.b16 %v626, %v625
      %v736 = vpack.c.b16 %v628, %v627
      %v737 = vpack.c.b16 %v630, %v629
      %v738 = vpack.c.b16 %v632, %v631
      %v739 = vpack.c.b16 %v634, %v633
      %v740 = vpack.c.b16 %v636, %v635
      %v741 = vpack.c.b16 %v638, %v637
      %v742 = vpack.c.b16 %v640, %v639
      %v743 = vpack.c.b16 %v642, %v641
      %v744 = vpack.c.b16 %v644, %v643
      %v745 = vpack.c.b16 %v646, %v645
      %v746 = vpack.c.b16 %v648, %v647
      %v747 = vpack.c.b16 %v650, %v649
      %v748 = vpack.c.b16 %v652, %v651
      %v749 = vpack.c.b16 %v654, %v653
      %v750 = vpack.c.b16 %v656, %v655
      %v751 = vpack.c.b16 %v658, %v657
      %v752 = vpack.c.b16 %v660, %v659
      %v753 = vpack.c.b16 %v662, %v661
      %v754 = vpack.c.b16 %v664, %v663
      %v755 = vpack.c.b16 %v666, %v665
      %v756 = vpack.c.b16 %v668, %v667
      %v757 = vpack.c.b16 %v670, %v669
      %v758 = vpack.c.b16 %v672, %v671
      %v759 = vpack.c.b16 %v674, %v673
      %v760 = vpack.c.b16 %v676, %v675
      %v761 = vpack.c.b16 %v678, %v677
      %v762 = vpack.c.b16 %v680, %v679
      %v763 = vpack.c.b16 %v682, %v681
      %v764 = vpack.c.b16 %v684, %v683
      %v765 = vpack.c.b16 %v686, %v685
      %v766 = vpack.c.b16 %v688, %v687
      %v767 = vpack.c.b16 %v690, %v689
      %v768 = vpack.c.b16 %v692, %v691
      %v769 = vpack.c.b16 %v694, %v693
      %v770 = vpack.c.b16 %v696, %v695
      %v771 = vpack.c.b16 %v698, %v697
      %v772 = vpack.c.b16 %v700, %v699
      %v773 = vpack.c.b16 %v702, %v701
      %v774 = vpack.c.b16 %v704, %v703
      %v775 = vpack.c.b16 %v706, %v705
      %v776 = vpack.c.b16 %v708, %v707
      %v777 = vpack.c.b16 %v710, %v709
      %v778 = vpack.c.b16 %v712, %v711
      %v779 = vpack.c.b16 %v714, %v713
      %v780 = vpack.c.b16 %v716, %v715
      %845 = vmatpush.bf16.msra.mxu0 %v724
      %846 = vmatpush.bf16.msra.mxu0 %v723
      %847 = vmatpush.bf16.msra.mxu0 %v722
      %848 = vmatpush.bf16.msra.mxu0 %v721
      %849 = vmatpush.bf16.msra.mxu0 %v720
      %850 = vmatpush.bf16.msra.mxu0 %v719
      %851 = vmatpush.bf16.msra.mxu0 %v718
      %852 = vmatpush.bf16.msra.mxu0 %v717
      %853 = vmatmul.bf16.gmra.mxu0 %v321
      %v854 = vpop.f32.mrf.mxu0
      %v855 = vadd.f32 %v459, %v854
      %v856 = vpop.f32.mrf.mxu0
      %857 = vdwg.mxu0
      %858 = vmatpush.bf16.msra.mxu0 %v732
      %859 = vmatpush.bf16.msra.mxu0 %v731
      %860 = vmatpush.bf16.msra.mxu0 %v730
      %861 = vmatpush.bf16.msra.mxu0 %v729
      %862 = vmatpush.bf16.msra.mxu0 %v728
      %863 = vmatpush.bf16.msra.mxu0 %v727
      %864 = vmatpush.bf16.msra.mxu0 %v726
      %865 = vmatpush.bf16.msra.mxu0 %v725
      %866 = vmatmul.bf16.gmra.mxu0 %v322
      %v867 = vpop.f32.mrf.mxu0
      %v868 = vadd.f32 %v855, %v867
      %v869 = vpop.f32.mrf.mxu0
      %870 = vdwg.mxu0
      %871 = vmatpush.bf16.msra.mxu0 %v740
      %872 = vmatpush.bf16.msra.mxu0 %v739
      %873 = vmatpush.bf16.msra.mxu0 %v738
      %874 = vmatpush.bf16.msra.mxu0 %v737
      %875 = vmatpush.bf16.msra.mxu0 %v736
      %876 = vmatpush.bf16.msra.mxu0 %v735
      %877 = vmatpush.bf16.msra.mxu0 %v734
      %878 = vmatpush.bf16.msra.mxu0 %v733
      %879 = vmatmul.bf16.gmra.mxu0 %v323
      %v880 = vpop.f32.mrf.mxu0
      %v881 = vadd.f32 %v868, %v880
      %v882 = vpop.f32.mrf.mxu0
      %883 = vdwg.mxu0
      %884 = vmatpush.bf16.msra.mxu0 %v748
      %885 = vmatpush.bf16.msra.mxu0 %v747
      %886 = vmatpush.bf16.msra.mxu0 %v746
      %887 = vmatpush.bf16.msra.mxu0 %v745
      %888 = vmatpush.bf16.msra.mxu0 %v744
      %889 = vmatpush.bf16.msra.mxu0 %v743
      %890 = vmatpush.bf16.msra.mxu0 %v742
      %891 = vmatpush.bf16.msra.mxu0 %v741
      %892 = vmatmul.bf16.gmra.mxu0 %v324
      %v893 = vpop.f32.mrf.mxu0
      %v894 = vadd.f32 %v881, %v893
      %v895 = vpop.f32.mrf.mxu0
      %896 = vdwg.mxu0
      %897 = vmatpush.bf16.msra.mxu0 %v756
      %898 = vmatpush.bf16.msra.mxu0 %v755
      %899 = vmatpush.bf16.msra.mxu0 %v754
      %900 = vmatpush.bf16.msra.mxu0 %v753
      %901 = vmatpush.bf16.msra.mxu0 %v752
      %902 = vmatpush.bf16.msra.mxu0 %v751
      %903 = vmatpush.bf16.msra.mxu0 %v750
      %904 = vmatpush.bf16.msra.mxu0 %v749
      %905 = vmatmul.bf16.gmra.mxu0 %v325
      %v906 = vpop.f32.mrf.mxu0
      %v907 = vadd.f32 %v894, %v906
      %v908 = vpop.f32.mrf.mxu0
      %909 = vdwg.mxu0
      %910 = vmatpush.bf16.msra.mxu0 %v764
      %911 = vmatpush.bf16.msra.mxu0 %v763
      %912 = vmatpush.bf16.msra.mxu0 %v762
      %913 = vmatpush.bf16.msra.mxu0 %v761
      %914 = vmatpush.bf16.msra.mxu0 %v760
      %915 = vmatpush.bf16.msra.mxu0 %v759
      %916 = vmatpush.bf16.msra.mxu0 %v758
      %917 = vmatpush.bf16.msra.mxu0 %v757
      %918 = vmatmul.bf16.gmra.mxu0 %v326
      %v919 = vpop.f32.mrf.mxu0
      %v920 = vadd.f32 %v907, %v919
      %v921 = vpop.f32.mrf.mxu0
      %922 = vdwg.mxu0
      %923 = vmatpush.bf16.msra.mxu0 %v772
      %924 = vmatpush.bf16.msra.mxu0 %v771
      %925 = vmatpush.bf16.msra.mxu0 %v770
      %926 = vmatpush.bf16.msra.mxu0 %v769
      %927 = vmatpush.bf16.msra.mxu0 %v768
      %928 = vmatpush.bf16.msra.mxu0 %v767
      %929 = vmatpush.bf16.msra.mxu0 %v766
      %930 = vmatpush.bf16.msra.mxu0 %v765
      %931 = vmatmul.bf16.gmra.mxu0 %v327
      %v932 = vpop.f32.mrf.mxu0
      %v933 = vadd.f32 %v920, %v932
      %v934 = vpop.f32.mrf.mxu0
      %935 = vdwg.mxu0
      %936 = vmatpush.bf16.msra.mxu0 %v780
      %937 = vmatpush.bf16.msra.mxu0 %v779
      %938 = vmatpush.bf16.msra.mxu0 %v778
      %939 = vmatpush.bf16.msra.mxu0 %v777
      %940 = vmatpush.bf16.msra.mxu0 %v776
      %941 = vmatpush.bf16.msra.mxu0 %v775
      %942 = vmatpush.bf16.msra.mxu0 %v774
      %943 = vmatpush.bf16.msra.mxu0 %v773
      %944 = vmatmul.bf16.gmra.mxu0 %v328
      %v945 = vpop.f32.mrf.mxu0
      %v946 = vadd.f32 %v933, %v945
      %v947 = vpop.f32.mrf.mxu0
      %948 = vdwg.mxu0
      %v949 = vmax.f32 %v946, 0.0
      %v950 = vpack.c.bf16 %v949, %v949
      %v951 = vld [vmem:[%s3] sm:$0xf]
      %v952 = vld [vmem:[%s3 + $0x4] sm:$0xf]
      %v953 = vld [vmem:[%s3 + $0x8] sm:$0xf]
      %v954 = vld [vmem:[%s3 + $0xc] sm:$0xf]
      %v955 = vld [vmem:[%s3 + $0x10] sm:$0xf]
      %v956 = vld [vmem:[%s3 + $0x14] sm:$0xf]
      %v957 = vld [vmem:[%s3 + $0x18] sm:$0xf]
      %v958 = vld [vmem:[%s3 + $0x1c] sm:$0xf]
      %v959 = vld [vmem:[%s3 + $0x20] sm:$0xf]
      %v960 = vld [vmem:[%s3 + $0x24] sm:$0xf]
      %v961 = vld [vmem:[%s3 + $0x28] sm:$0xf]
      %v962 = vld [vmem:[%s3 + $0x2c] sm:$0xf]
      %v963 = vld [vmem:[%s3 + $0x30] sm:$0xf]
      %v964 = vld [vmem:[%s3 + $0x34] sm:$0xf]
      %v965 = vld [vmem:[%s3 + $0x38] sm:$0xf]
      %v966 = vld [vmem:[%s3 + $0x3c] sm:$0xf]
      %v967 = vld [vmem:[%s4] sm:$0x1]
      %v969 = vperm.slane %v967, 0
      %v987 = vunpack.c.l.b16 %v951
      %v988 = vunpack.c.l.b16 %v952
      %v989 = vunpack.c.l.b16 %v953
      %v990 = vunpack.c.l.b16 %v954
      %v991 = vunpack.c.l.b16 %v955
      %v992 = vunpack.c.l.b16 %v956
      %v993 = vunpack.c.l.b16 %v957
      %v994 = vunpack.c.l.b16 %v958
      %v995 = vunpack.c.l.b16 %v959
      %v996 = vunpack.c.l.b16 %v960
      %v997 = vunpack.c.l.b16 %v961
      %v998 = vunpack.c.l.b16 %v962
      %v999 = vunpack.c.l.b16 %v963
      %v1000 = vunpack.c.l.b16 %v964
      %v1001 = vunpack.c.l.b16 %v965
      %v1002 = vunpack.c.l.b16 %v966
      %v1003 = vpack.c.b16 %v988, %v987
      %v1004 = vpack.c.b16 %v990, %v989
      %v1005 = vpack.c.b16 %v992, %v991
      %v1006 = vpack.c.b16 %v994, %v993
      %v1007 = vpack.c.b16 %v996, %v995
      %v1008 = vpack.c.b16 %v998, %v997
      %v1009 = vpack.c.b16 %v1000, %v999
      %v1010 = vpack.c.b16 %v1002, %v1001
      %1019 = vmatpush.bf16.msra.mxu0 %v1010
      %1020 = vmatpush.bf16.msra.mxu0 %v1009
      %1021 = vmatpush.bf16.msra.mxu0 %v1008
      %1022 = vmatpush.bf16.msra.mxu0 %v1007
      %1023 = vmatpush.bf16.msra.mxu0 %v1006
      %1024 = vmatpush.bf16.msra.mxu0 %v1005
      %1025 = vmatpush.bf16.msra.mxu0 %v1004
      %1026 = vmatpush.bf16.msra.mxu0 %v1003
      %1027 = vmatmul.bf16.gmra.mxu0 %v950
      %v1028 = vpop.f32.mrf.mxu0
      %v1029 = vadd.f32 %v969, %v1028
      %v1030 = vpop.f32.mrf.mxu0
      %1031 = vdwg.mxu0
      %v1032 = vmax.f32 %v1029, 0.0
      %v1033 = vpack.c.bf16 %v1032, %v1032
      %v1034 = vld [vmem:[%s5] sm:$0xf]
      %v1035 = vld [vmem:[%s5 + $0x4] sm:$0xf]
      %v1036 = vld [vmem:[%s5 + $0x8] sm:$0xf]
      %v1037 = vld [vmem:[%s5 + $0xc] sm:$0xf]
      %v1038 = vld [vmem:[%s5 + $0x10] sm:$0xf]
      %v1039 = vld [vmem:[%s5 + $0x14] sm:$0xf]
      %v1040 = vld [vmem:[%s5 + $0x18] sm:$0xf]
      %v1041 = vld [vmem:[%s5 + $0x1c] sm:$0xf]
      %v1042 = vld [vmem:[%s5 + $0x20] sm:$0xf]
      %v1043 = vld [vmem:[%s5 + $0x24] sm:$0xf]
      %v1044 = vld [vmem:[%s5 + $0x28] sm:$0xf]
      %v1045 = vld [vmem:[%s5 + $0x2c] sm:$0xf]
      %v1046 = vld [vmem:[%s5 + $0x30] sm:$0xf]
      %v1047 = vld [vmem:[%s5 + $0x34] sm:$0xf]
      %v1048 = vld [vmem:[%s5 + $0x38] sm:$0xf]
      %v1049 = vld [vmem:[%s5 + $0x3c] sm:$0xf]
      %v1050 = vld [vmem:[%s6] sm:$0x1]
      %v1052 = vperm.slane %v1050, 0
      %v1070 = vunpack.c.l.b16 %v1034
      %v1071 = vunpack.c.l.b16 %v1035
      %v1072 = vunpack.c.l.b16 %v1036
      %v1073 = vunpack.c.l.b16 %v1037
      %v1074 = vunpack.c.l.b16 %v1038
      %v1075 = vunpack.c.l.b16 %v1039
      %v1076 = vunpack.c.l.b16 %v1040
      %v1077 = vunpack.c.l.b16 %v1041
      %v1078 = vunpack.c.l.b16 %v1042
      %v1079 = vunpack.c.l.b16 %v1043
      %v1080 = vunpack.c.l.b16 %v1044
      %v1081 = vunpack.c.l.b16 %v1045
      %v1082 = vunpack.c.l.b16 %v1046
      %v1083 = vunpack.c.l.b16 %v1047
      %v1084 = vunpack.c.l.b16 %v1048
      %v1085 = vunpack.c.l.b16 %v1049
      %v1086 = vpack.c.b16 %v1071, %v1070
      %v1087 = vpack.c.b16 %v1073, %v1072
      %v1088 = vpack.c.b16 %v1075, %v1074
      %v1089 = vpack.c.b16 %v1077, %v1076
      %v1090 = vpack.c.b16 %v1079, %v1078
      %v1091 = vpack.c.b16 %v1081, %v1080
      %v1092 = vpack.c.b16 %v1083, %v1082
      %v1093 = vpack.c.b16 %v1085, %v1084
      %1102 = vmatpush.bf16.msra.mxu0 %v1093
      %1103 = vmatpush.bf16.msra.mxu0 %v1092
      %1104 = vmatpush.bf16.msra.mxu0 %v1091
      %1105 = vmatpush.bf16.msra.mxu0 %v1090
      %1106 = vmatpush.bf16.msra.mxu0 %v1089
      %1107 = vmatpush.bf16.msra.mxu0 %v1088
      %1108 = vmatpush.bf16.msra.mxu0 %v1087
      %1109 = vmatpush.bf16.msra.mxu0 %v1086
      %1110 = vmatmul.bf16.gmra.mxu0 %v1033
      %v1111 = vpop.f32.mrf.mxu0
      %v1112 = vadd.f32 %v1052, %v1111
      %v1113 = vpop.f32.mrf.mxu0
      %1114 = vdwg.mxu0
      %v1115 = vpack.c.bf16 %v1112, %v1112
      %1116 = vst [vmem:[%s309] sm:$0xf] %v1115
      %v1117 = vmul.f32 %v949, %v949
      %v1118 = vmul.f32 %v1032, %v1032
      %s1119 = smul.u32 %s20, 8
      %v1120 = vlaneseq
      %v1121 = vshrl.u32 %v1120, 7
      %v1122 = vstv %s1119
      %v1123 = vadd.s32 %v1122, %v1121
      %vm1124 = vcmp.lt.s32.totalorder %v1123, 2
      %v1125 = vsel %vm1124, 1, 0
      %vm1126 = vcmp.eq.s32.totalorder %v1125, 1
      %v1127 = vsel %vm1126, %v1117, 0.0
      %v1128 = vsel %vm1126, %v1118, 0.0
      %1129 = vadd.xlane.f32.xlu0 %v1127
      %v1130 = vpop.xlane.xlu0 %1129
      %v1131 = vrot.slane %v1130, 4
      %v1132 = vadd.f32 %v1130, %v1131
      %v1133 = vrot.slane %v1132, 2
      %v1134 = vadd.f32 %v1132, %v1133
      %v1135 = vrot.slane %v1134, 1
      %v1136 = vadd.f32 %v1134, %v1135
      %s1137 = vtos %v1136
      %1138 = vadd.xlane.f32.xlu0 %v1128
      %v1139 = vpop.xlane.xlu0 %1138
      %v1140 = vrot.slane %v1139, 4
      %v1141 = vadd.f32 %v1139, %v1140
      %v1142 = vrot.slane %v1141, 2
      %v1143 = vadd.f32 %v1141, %v1142
      %v1144 = vrot.slane %v1143, 1
      %v1145 = vadd.f32 %v1143, %v1144
      %s1146 = vtos %v1145
      %s1147 = sadd.f32 %s1137, %s1146
      %v1148 = vstv %s1147
      %v1149 = vadd.f32 %v1148, 0.0
      %1150 = vst [vmem:[%s312] sm:$0x1] %v1149
      %p1151 = scmp.lt.s32.totalorder %s20, 1
      %s1152 = scalar_select %p1151, %s20, 1
      %s1153 = smul.addr %s1152, 4
      %s1154 = scalar_lea.vmem %s7, %s1153
      %p1155 = scmp.lt.s32.totalorder %s20, 1
      %s1156 = scalar_select %p1155, %s20, 1
      %s1157 = scalar_lea.vmem %s8, %s1156
      // Predicated region
      $region49: #{classifier_forward.1} parent=47 // pred_check
        %p1158 = pneg %p190
      $region50: #{classifier_forward.1} parent=47 // pred_check_branch
        %1160 = sbr.rel (%p1158) target = $region52
      $region51: #{classifier_forward.1} parent=47 // pred_region
        _
      $region52: #{classifier_forward.1} parent=47 // pred_fallthru
        _
      // Predicated region
      $region53: #{classifier_forward.1} parent=47 // pred_check
        %p1161 = pneg %p216
      $region54: #{classifier_forward.1} parent=47 // pred_check_branch
        %1163 = sbr.rel (%p1161) target = $region56
      $region55: #{classifier_forward.1} parent=47 // pred_region
        _
      $region56: #{classifier_forward.1} parent=47 // pred_fallthru
        _
    $region48: #{classifier_forward.1} parent=5 // pred_fallthru
      _
    %p1164 = scmp.le.s32.totalorder 2, %s15
    // Predicated region
    $region57: #{classifier_forward.1} parent=5 // pred_check
      %p1165 = pneg %p1164
    $region58: #{classifier_forward.1} parent=5 // pred_check_branch
      %1167 = sbr.rel (%p1165) target = $region60
    $region59: #{classifier_forward.1} parent=5 // pred_region
      %s1168 = ssub.s32 %s15, 2
      // Predicated region
      $region61: #{classifier_forward.1} parent=59 // pred_check
        %p1169 = pneg %p196
      $region62: #{classifier_forward.1} parent=59 // pred_check_branch
        %1171 = sbr.rel (%p1169) target = $region64
      $region63: #{classifier_forward.1} parent=59 // pred_region
        %p1172 = scmp.lt.s32.totalorder %s21, 1
        %s1173 = scalar_select %p1172, %s21, 1
        %s1174 = smul.addr %s1173, 4
        %s1175 = scalar_lea.vmem %s7, %s1174
      $region64: #{classifier_forward.1} parent=59 // pred_fallthru
        _
      // Predicated region
      $region65: #{classifier_forward.1} parent=59 // pred_check
        %p1176 = pneg %p222
      $region66: #{classifier_forward.1} parent=59 // pred_check_branch
        %1178 = sbr.rel (%p1176) target = $region68
      $region67: #{classifier_forward.1} parent=59 // pred_region
        %p1179 = scmp.lt.s32.totalorder %s21, 1
        %s1180 = scalar_select %p1179, %s21, 1
        %s1181 = scalar_lea.vmem %s8, %s1180
      $region68: #{classifier_forward.1} parent=59 // pred_fallthru
        _
    $region60: #{classifier_forward.1} parent=5 // pred_fallthru
      _
  $region6: #{classifier_forward.1} parent=0 // loop_footer
    %s19 = sadd.s32 1, %s15
  $region7: #{classifier_forward.1} parent=0 // loop_footer_branch
    %14 = sbr.rel target = $region3
  $region8: #{classifier_forward.1} parent=0 // loop_exit
    _

</llo_original>
